<compile_context>
chip_gen: v5e
topology: v5e:2x2
jax: 0.10.0
libtpu: 0.0.40
codegen_flags: <defaults>
</compile_context>

<pallas_src>
import math

import jax
import jax.numpy as jnp
from jax.experimental import pallas as pl
from jax.experimental.pallas import tpu as pltpu

# ----- model hyper-parameters (small, consistent with the module) -----------
ENC_HIDDEN = 48                      # enc_hidden_size
N_HEADS = 3
HEAD_DIM = ENC_HIDDEN // N_HEADS     # 16
SEQ = 8
BATCH = 2


def attention_kernel(x_ref, wq_ref, bq_ref, wo_ref, bo_ref, out_ref, attn_ref):
    """Single invocation; everything resident in VMEM.

    x_ref    : (B*3S, E) f32   [q; k; v] rows, b-major then {q,k,v} then s
    wq_ref   : (E, E)    bf16  fc_q weight, pre-transposed (x @ wq_t)
    bq_ref   : (1, E)    f32   fc_q bias
    wo_ref   : (B*H, Dh, E) bf16  per-head row-slices of fc_o weight (pre-transposed,
                                  replicated over batch at prep time)
    bo_ref   : (1, E)    f32   fc_o bias
    out_ref  : (B, S, E) f32   module output x
    attn_ref : (B*H, S, S) f32 attention probabilities (wrapper -> (B,H,S,S))
    """
    B, H, S, E, Dh = BATCH, N_HEADS, SEQ, ENC_HIDDEN, HEAD_DIM

    # ---- fused Q/K/V projection: ONE (48,48)@(48,48) MXU op, bias added once.
    # NOTE: the reference module projects Q, K AND V with fc_q.
    P = jnp.dot(x_ref[...].astype(jnp.bfloat16), wq_ref[...],
                preferred_element_type=jnp.float32)                  # (B*3S, E) f32
    P = P + bq_ref[...]                                              # f32 bias add
    P = P.reshape(B, 3, S, E)                                        # free leading split

    # ---- split heads AFTER the fused projection (static lane slices + stack).
    def gather_heads(part):
        tiles = [P[b, part, :, h * Dh:(h + 1) * Dh]                  # (S, Dh)
                 for b in range(B) for h in range(H)]
        return jnp.stack(tiles, axis=0)                              # (B*H, S, Dh)

    Q = gather_heads(0).astype(jnp.bfloat16)
    K = gather_heads(1).astype(jnp.bfloat16)
    V = gather_heads(2).astype(jnp.bfloat16)

    inv_scale = jnp.float32(1.0 / math.sqrt(Dh))
    energy = jnp.einsum("nqd,nkd->nqk", Q, K,
                        preferred_element_type=jnp.float32) * inv_scale  # (BH,S,S) f32

    # ---- one fused softmax pass over all (batch, head) tiles, exact divide.
    m = jnp.max(energy, axis=-1, keepdims=True)
    p = jnp.exp(energy - m)
    l = jnp.sum(p, axis=-1, keepdims=True)
    attn = p / l                                                     # (BH, S, S) f32

    attn_ref[...] = attn                                             # single store
    # TODO(synk): training-mode dropout(p=0.5) on `attn` not implemented
    # (eval-mode identity semantics assumed).

    ctx = jnp.einsum("nqk,nkd->nqd", attn.astype(jnp.bfloat16), V,
                     preferred_element_type=jnp.float32)             # (BH, S, Dh) f32

    # fc_o folded per head: ctx_h @ Wo_t[h*Dh:(h+1)*Dh, :]; heads reduced with a
    # leading-dim sum, bias added once, single store (no per-batch loop).
    xo = jnp.einsum("nsd,nde->nse", ctx.astype(jnp.bfloat16), wo_ref[...],
                    preferred_element_type=jnp.float32)              # (BH, S, E) f32
    out_ref[...] = xo.reshape(B, H, S, E).sum(axis=1) + bo_ref[...]  # (B, S, E)


def prepare_params(params):
    """One-time, hoisted out of the forward path: layout prep + bf16 weight casts."""
    E, H, Dh, B = ENC_HIDDEN, N_HEADS, HEAD_DIM, BATCH
    wq_t = params["wq"].T.astype(jnp.bfloat16)                       # (E, E)
    bq = params["bq"].reshape(1, E).astype(jnp.float32)              # (1, E)
    wo_h = params["wo"].T.reshape(H, Dh, E)                          # (H, Dh, E)
    wo_bh = jnp.tile(wo_h, (B, 1, 1)).astype(jnp.bfloat16)           # (B*H, Dh, E)
    bo = params["bo"].reshape(1, E).astype(jnp.float32)              # (1, E)
    return {"wq_t": wq_t, "bq": bq, "wo_bh": wo_bh, "bo": bo}


@jax.jit
def attention_forward(query, key, value, prep):
    """query/key/value: (S, B, E) float32, exactly like the PyTorch forward input."""
    B, S, E, H = BATCH, SEQ, ENC_HIDDEN, N_HEADS

    # glue: permute (S, B, E) -> (B, S, E) and stack [q;k;v] as one 2-D operand.
    q = jnp.transpose(query, (1, 0, 2))
    k = jnp.transpose(key, (1, 0, 2))
    v = jnp.transpose(value, (1, 0, 2))
    xqkv = jnp.concatenate([q, k, v], axis=1).reshape(B * 3 * S, E)  # (48, 48)

    x, attn_flat = pl.pallas_call(
        attention_kernel,
        out_shape=(
            jax.ShapeDtypeStruct((B, S, E), jnp.float32),
            jax.ShapeDtypeStruct((B * H, S, S), jnp.float32),
        ),
        # No grid: a single invocation; every operand is a full-array block in VMEM
        # (total working set ~30 KiB, fits every generation incl. v7x's 64 MiB).
        in_specs=[pl.BlockSpec(memory_space=pltpu.MemorySpace.VMEM)] * 5,
        out_specs=(
            pl.BlockSpec(memory_space=pltpu.MemorySpace.VMEM),
            pl.BlockSpec(memory_space=pltpu.MemorySpace.VMEM),
        ),
    )(xqkv, prep["wq_t"], prep["bq"], prep["wo_bh"], prep["bo"])

    return x, attn_flat.reshape(B, H, S, S)


def reference_forward(query, key, value, params):
    """Pure-JAX f32 reference mirroring the PyTorch forward (eval mode)."""
    q = jnp.transpose(query, (1, 0, 2))
    k = jnp.transpose(key, (1, 0, 2))
    v = jnp.transpose(value, (1, 0, 2))
    B, S, E = q.shape

    def lin(x, w, b):
        return x @ w.T + b

    Q = lin(q, params["wq"], params["bq"])
    K = lin(k, params["wq"], params["bq"])
    V = lin(v, params["wq"], params["bq"])

    Q = Q.reshape(B, S, N_HEADS, HEAD_DIM).transpose(0, 2, 1, 3)
    K = K.reshape(B, S, N_HEADS, HEAD_DIM).transpose(0, 2, 1, 3)
    V = V.reshape(B, S, N_HEADS, HEAD_DIM).transpose(0, 2, 1, 3)

    energy = jnp.einsum("bhqd,bhkd->bhqk", Q, K) / jnp.sqrt(jnp.float32(HEAD_DIM))
    attn = jax.nn.softmax(energy, axis=-1)
    x = jnp.einsum("bhqk,bhkd->bhqd", attn, V)
    x = x.transpose(0, 2, 1, 3).reshape(B, S, E)
    x = lin(x, params["wo"], params["bo"])
    return x, attn


def init_params(key):
    """Deterministic parameter init (shapes match nn.Linear(E, E))."""
    k1, k2, k3, k4 = jax.random.split(key, 4)
    bound = 1.0 / math.sqrt(ENC_HIDDEN)
    return {
        "wq": jax.random.uniform(k1, (ENC_HIDDEN, ENC_HIDDEN), jnp.float32, -bound, bound),
        "bq": jax.random.uniform(k2, (ENC_HIDDEN,), jnp.float32, -bound, bound),
        "wo": jax.random.uniform(k3, (ENC_HIDDEN, ENC_HIDDEN), jnp.float32, -bound, bound),
        "bo": jax.random.uniform(k4, (ENC_HIDDEN,), jnp.float32, -bound, bound),
    }


if __name__ == "__main__":
    root = jax.random.PRNGKey(0)
    kp, kq, kk, kv = jax.random.split(root, 4)

    params = init_params(kp)
    prep = prepare_params(params)        # hoisted one-time layout prep (review item 2)

    # inputs in PyTorch convention: (seq, batch, enc_hidden)
    query = jax.random.normal(kq, (SEQ, BATCH, ENC_HIDDEN), jnp.float32)
    key_in = jax.random.normal(kk, (SEQ, BATCH, ENC_HIDDEN), jnp.float32)
    value = jax.random.normal(kv, (SEQ, BATCH, ENC_HIDDEN), jnp.float32)

    x, attn = attention_forward(query, key_in, value, prep)
    x = jax.block_until_ready(x)
    attn = jax.block_until_ready(attn)

    x_ref, attn_ref = reference_forward(query, key_in, value, params)

    assert x.shape == (BATCH, SEQ, ENC_HIDDEN)
    assert attn.shape == (BATCH, N_HEADS, SEQ, SEQ)
    # tolerances account for bf16 MXU operands (f32 accumulation & f32 elementwise).
    assert jnp.allclose(attn, attn_ref, atol=1e-2, rtol=1e-2), \
        float(jnp.max(jnp.abs(attn - attn_ref)))
    assert jnp.allclose(x, x_ref, atol=5e-2, rtol=5e-2), \
        float(jnp.max(jnp.abs(x - x_ref)))

    print("KERNEL_OK")
</pallas_src>

<mosaic_0001>
module attributes {stable_mosaic.version = 11 : i64} {
  func.func @attention_kernel(%arg0: memref<48x48xf32, #tpu.memory_space<vmem>>, %arg1: memref<48x48xbf16, #tpu.memory_space<vmem>>, %arg2: memref<1x48xf32, #tpu.memory_space<vmem>>, %arg3: memref<6x16x48xbf16, #tpu.memory_space<vmem>>, %arg4: memref<1x48xf32, #tpu.memory_space<vmem>>, %arg5: memref<2x8x48xf32, #tpu.memory_space<vmem>>, %arg6: memref<6x8x8xf32, #tpu.memory_space<vmem>>) attributes {dimension_semantics = [], scalar_prefetch = 0 : i64, scratch_operands = 0 : i64, tpu.core_type = #tpu.core_type<tc>} {
    %c0 = arith.constant 0 : index
    %c0_0 = arith.constant 0 : index
    %0 = vector.load %arg0[%c0, %c0_0] : memref<48x48xf32, #tpu.memory_space<vmem>>, vector<48x48xf32>
    %1 = arith.truncf %0 : vector<48x48xf32> to vector<48x48xbf16>
    %c0_1 = arith.constant 0 : index
    %c0_2 = arith.constant 0 : index
    %2 = vector.load %arg1[%c0_1, %c0_2] : memref<48x48xbf16, #tpu.memory_space<vmem>>, vector<48x48xbf16>
    %cst = arith.constant dense<0.000000e+00> : vector<48x48xf32>
    %3 = tpu.matmul %1, %2, %cst {dimension_numbers = #tpu.dot_dimension_numbers<[1], [0], [0], [1], [0, 0, 1, 1], [], []>} : vector<48x48xbf16>, vector<48x48xbf16>, vector<48x48xf32> -> vector<48x48xf32>
    %c0_3 = arith.constant 0 : index
    %c0_4 = arith.constant 0 : index
    %4 = vector.load %arg2[%c0_3, %c0_4] : memref<1x48xf32, #tpu.memory_space<vmem>>, vector<1x48xf32>
    %5 = vector.broadcast %4 : vector<1x48xf32> to vector<48x48xf32>
    %6 = arith.addf %3, %5 : vector<48x48xf32>
    %7 = vector.shape_cast %6 : vector<48x48xf32> to vector<2x3x8x48xf32>
    %8 = vector.extract_strided_slice %7 {offsets = [0, 0, 0, 0], sizes = [1, 1, 8, 16], strides = [1, 1, 1, 1]} : vector<2x3x8x48xf32> to vector<1x1x8x16xf32>
    %9 = vector.shape_cast %8 : vector<1x1x8x16xf32> to vector<8x16xf32>
    %10 = vector.extract_strided_slice %7 {offsets = [0, 0, 0, 16], sizes = [1, 1, 8, 16], strides = [1, 1, 1, 1]} : vector<2x3x8x48xf32> to vector<1x1x8x16xf32>
    %11 = vector.shape_cast %10 : vector<1x1x8x16xf32> to vector<8x16xf32>
    %12 = vector.extract_strided_slice %7 {offsets = [0, 0, 0, 32], sizes = [1, 1, 8, 16], strides = [1, 1, 1, 1]} : vector<2x3x8x48xf32> to vector<1x1x8x16xf32>
    %13 = vector.shape_cast %12 : vector<1x1x8x16xf32> to vector<8x16xf32>
    %14 = vector.extract_strided_slice %7 {offsets = [1, 0, 0, 0], sizes = [1, 1, 8, 16], strides = [1, 1, 1, 1]} : vector<2x3x8x48xf32> to vector<1x1x8x16xf32>
    %15 = vector.shape_cast %14 : vector<1x1x8x16xf32> to vector<8x16xf32>
    %16 = vector.extract_strided_slice %7 {offsets = [1, 0, 0, 16], sizes = [1, 1, 8, 16], strides = [1, 1, 1, 1]} : vector<2x3x8x48xf32> to vector<1x1x8x16xf32>
    %17 = vector.shape_cast %16 : vector<1x1x8x16xf32> to vector<8x16xf32>
    %18 = vector.extract_strided_slice %7 {offsets = [1, 0, 0, 32], sizes = [1, 1, 8, 16], strides = [1, 1, 1, 1]} : vector<2x3x8x48xf32> to vector<1x1x8x16xf32>
    %19 = vector.shape_cast %18 : vector<1x1x8x16xf32> to vector<8x16xf32>
    %20 = vector.shape_cast %9 : vector<8x16xf32> to vector<1x8x16xf32>
    %21 = vector.shape_cast %11 : vector<8x16xf32> to vector<1x8x16xf32>
    %22 = vector.shape_cast %13 : vector<8x16xf32> to vector<1x8x16xf32>
    %23 = vector.shape_cast %15 : vector<8x16xf32> to vector<1x8x16xf32>
    %24 = vector.shape_cast %17 : vector<8x16xf32> to vector<1x8x16xf32>
    %25 = vector.shape_cast %19 : vector<8x16xf32> to vector<1x8x16xf32>
    %26 = tpu.concatenate %20, %21, %22, %23, %24, %25 in 0 : vector<1x8x16xf32>, vector<1x8x16xf32>, vector<1x8x16xf32>, vector<1x8x16xf32>, vector<1x8x16xf32>, vector<1x8x16xf32> -> vector<6x8x16xf32>
    %27 = arith.truncf %26 : vector<6x8x16xf32> to vector<6x8x16xbf16>
    %28 = vector.extract_strided_slice %7 {offsets = [0, 1, 0, 0], sizes = [1, 1, 8, 16], strides = [1, 1, 1, 1]} : vector<2x3x8x48xf32> to vector<1x1x8x16xf32>
    %29 = vector.shape_cast %28 : vector<1x1x8x16xf32> to vector<8x16xf32>
    %30 = vector.extract_strided_slice %7 {offsets = [0, 1, 0, 16], sizes = [1, 1, 8, 16], strides = [1, 1, 1, 1]} : vector<2x3x8x48xf32> to vector<1x1x8x16xf32>
    %31 = vector.shape_cast %30 : vector<1x1x8x16xf32> to vector<8x16xf32>
    %32 = vector.extract_strided_slice %7 {offsets = [0, 1, 0, 32], sizes = [1, 1, 8, 16], strides = [1, 1, 1, 1]} : vector<2x3x8x48xf32> to vector<1x1x8x16xf32>
    %33 = vector.shape_cast %32 : vector<1x1x8x16xf32> to vector<8x16xf32>
    %34 = vector.extract_strided_slice %7 {offsets = [1, 1, 0, 0], sizes = [1, 1, 8, 16], strides = [1, 1, 1, 1]} : vector<2x3x8x48xf32> to vector<1x1x8x16xf32>
    %35 = vector.shape_cast %34 : vector<1x1x8x16xf32> to vector<8x16xf32>
    %36 = vector.extract_strided_slice %7 {offsets = [1, 1, 0, 16], sizes = [1, 1, 8, 16], strides = [1, 1, 1, 1]} : vector<2x3x8x48xf32> to vector<1x1x8x16xf32>
    %37 = vector.shape_cast %36 : vector<1x1x8x16xf32> to vector<8x16xf32>
    %38 = vector.extract_strided_slice %7 {offsets = [1, 1, 0, 32], sizes = [1, 1, 8, 16], strides = [1, 1, 1, 1]} : vector<2x3x8x48xf32> to vector<1x1x8x16xf32>
    %39 = vector.shape_cast %38 : vector<1x1x8x16xf32> to vector<8x16xf32>
    %40 = vector.shape_cast %29 : vector<8x16xf32> to vector<1x8x16xf32>
    %41 = vector.shape_cast %31 : vector<8x16xf32> to vector<1x8x16xf32>
    %42 = vector.shape_cast %33 : vector<8x16xf32> to vector<1x8x16xf32>
    %43 = vector.shape_cast %35 : vector<8x16xf32> to vector<1x8x16xf32>
    %44 = vector.shape_cast %37 : vector<8x16xf32> to vector<1x8x16xf32>
    %45 = vector.shape_cast %39 : vector<8x16xf32> to vector<1x8x16xf32>
    %46 = tpu.concatenate %40, %41, %42, %43, %44, %45 in 0 : vector<1x8x16xf32>, vector<1x8x16xf32>, vector<1x8x16xf32>, vector<1x8x16xf32>, vector<1x8x16xf32>, vector<1x8x16xf32> -> vector<6x8x16xf32>
    %47 = arith.truncf %46 : vector<6x8x16xf32> to vector<6x8x16xbf16>
    %48 = vector.extract_strided_slice %7 {offsets = [0, 2, 0, 0], sizes = [1, 1, 8, 16], strides = [1, 1, 1, 1]} : vector<2x3x8x48xf32> to vector<1x1x8x16xf32>
    %49 = vector.shape_cast %48 : vector<1x1x8x16xf32> to vector<8x16xf32>
    %50 = vector.extract_strided_slice %7 {offsets = [0, 2, 0, 16], sizes = [1, 1, 8, 16], strides = [1, 1, 1, 1]} : vector<2x3x8x48xf32> to vector<1x1x8x16xf32>
    %51 = vector.shape_cast %50 : vector<1x1x8x16xf32> to vector<8x16xf32>
    %52 = vector.extract_strided_slice %7 {offsets = [0, 2, 0, 32], sizes = [1, 1, 8, 16], strides = [1, 1, 1, 1]} : vector<2x3x8x48xf32> to vector<1x1x8x16xf32>
    %53 = vector.shape_cast %52 : vector<1x1x8x16xf32> to vector<8x16xf32>
    %54 = vector.extract_strided_slice %7 {offsets = [1, 2, 0, 0], sizes = [1, 1, 8, 16], strides = [1, 1, 1, 1]} : vector<2x3x8x48xf32> to vector<1x1x8x16xf32>
    %55 = vector.shape_cast %54 : vector<1x1x8x16xf32> to vector<8x16xf32>
    %56 = vector.extract_strided_slice %7 {offsets = [1, 2, 0, 16], sizes = [1, 1, 8, 16], strides = [1, 1, 1, 1]} : vector<2x3x8x48xf32> to vector<1x1x8x16xf32>
    %57 = vector.shape_cast %56 : vector<1x1x8x16xf32> to vector<8x16xf32>
    %58 = vector.extract_strided_slice %7 {offsets = [1, 2, 0, 32], sizes = [1, 1, 8, 16], strides = [1, 1, 1, 1]} : vector<2x3x8x48xf32> to vector<1x1x8x16xf32>
    %59 = vector.shape_cast %58 : vector<1x1x8x16xf32> to vector<8x16xf32>
    %60 = vector.shape_cast %49 : vector<8x16xf32> to vector<1x8x16xf32>
    %61 = vector.shape_cast %51 : vector<8x16xf32> to vector<1x8x16xf32>
    %62 = vector.shape_cast %53 : vector<8x16xf32> to vector<1x8x16xf32>
    %63 = vector.shape_cast %55 : vector<8x16xf32> to vector<1x8x16xf32>
    %64 = vector.shape_cast %57 : vector<8x16xf32> to vector<1x8x16xf32>
    %65 = vector.shape_cast %59 : vector<8x16xf32> to vector<1x8x16xf32>
    %66 = tpu.concatenate %60, %61, %62, %63, %64, %65 in 0 : vector<1x8x16xf32>, vector<1x8x16xf32>, vector<1x8x16xf32>, vector<1x8x16xf32>, vector<1x8x16xf32>, vector<1x8x16xf32> -> vector<6x8x16xf32>
    %67 = arith.truncf %66 : vector<6x8x16xf32> to vector<6x8x16xbf16>
    "tpu.trace_start"() <{level = 10 : i32, message = "nqd,nkd->nqk"}> : () -> ()
    %cst_5 = arith.constant dense<0.000000e+00> : vector<6x8x8xf32>
    %68 = tpu.matmul %27, %47, %cst_5 {dimension_numbers = #tpu.dot_dimension_numbers<[2], [2], [1], [1], [0, 0, 0, 1, 1, 1], [0], [0]>} : vector<6x8x16xbf16>, vector<6x8x16xbf16>, vector<6x8x8xf32> -> vector<6x8x8xf32>
    "tpu.trace_stop"() : () -> ()
    %cst_6 = arith.constant 2.500000e-01 : f32
    %69 = vector.broadcast %cst_6 : f32 to vector<6x8x8xf32>
    %70 = arith.mulf %68, %69 : vector<6x8x8xf32>
    %cst_7 = arith.constant dense<0xFF800000> : vector<6x8xf32>
    %71 = vector.multi_reduction <maximumf>, %70, %cst_7 [2] : vector<6x8x8xf32> to vector<6x8xf32>
    %72 = vector.shape_cast %71 : vector<6x8xf32> to vector<6x8x1xf32>
    %73 = vector.broadcast %72 : vector<6x8x1xf32> to vector<6x8x8xf32>
    %74 = arith.subf %70, %73 : vector<6x8x8xf32>
    %75 = math.exp %74 : vector<6x8x8xf32>
    %cst_8 = arith.constant dense<0.000000e+00> : vector<6x8xf32>
    %76 = vector.multi_reduction <add>, %75, %cst_8 [2] : vector<6x8x8xf32> to vector<6x8xf32>
    %77 = vector.shape_cast %76 : vector<6x8xf32> to vector<6x8x1xf32>
    %78 = vector.broadcast %77 : vector<6x8x1xf32> to vector<6x8x8xf32>
    %79 = arith.divf %75, %78 : vector<6x8x8xf32>
    %c0_9 = arith.constant 0 : index
    %c0_10 = arith.constant 0 : index
    %c0_11 = arith.constant 0 : index
    %80 = vector.load %arg6[%c0_9, %c0_10, %c0_11] : memref<6x8x8xf32, #tpu.memory_space<vmem>>, vector<6x8x8xf32>
    tpu.vector_store %arg6[%c0_9, %c0_10, %c0_11], %79 {strides = array<i32>} : memref<6x8x8xf32, #tpu.memory_space<vmem>>, vector<6x8x8xf32>,
    %81 = arith.truncf %79 : vector<6x8x8xf32> to vector<6x8x8xbf16>
    "tpu.trace_start"() <{level = 10 : i32, message = "nqk,nkd->nqd"}> : () -> ()
    %cst_12 = arith.constant dense<0.000000e+00> : vector<6x8x16xf32>
    %82 = tpu.matmul %81, %67, %cst_12 {dimension_numbers = #tpu.dot_dimension_numbers<[2], [1], [1], [2], [0, 0, 0, 1, 1, 2], [0], [0]>} : vector<6x8x8xbf16>, vector<6x8x16xbf16>, vector<6x8x16xf32> -> vector<6x8x16xf32>
    "tpu.trace_stop"() : () -> ()
    %83 = arith.truncf %82 : vector<6x8x16xf32> to vector<6x8x16xbf16>
    %c0_13 = arith.constant 0 : index
    %c0_14 = arith.constant 0 : index
    %c0_15 = arith.constant 0 : index
    %84 = vector.load %arg3[%c0_13, %c0_14, %c0_15] : memref<6x16x48xbf16, #tpu.memory_space<vmem>>, vector<6x16x48xbf16>
    "tpu.trace_start"() <{level = 10 : i32, message = "nsd,nde->nse"}> : () -> ()
    %cst_16 = arith.constant dense<0.000000e+00> : vector<6x8x48xf32>
    %85 = tpu.matmul %83, %84, %cst_16 {dimension_numbers = #tpu.dot_dimension_numbers<[2], [1], [1], [2], [0, 0, 0, 1, 1, 2], [0], [0]>} : vector<6x8x16xbf16>, vector<6x16x48xbf16>, vector<6x8x48xf32> -> vector<6x8x48xf32>
    "tpu.trace_stop"() : () -> ()
    %86 = vector.shape_cast %85 : vector<6x8x48xf32> to vector<2x3x8x48xf32>
    %cst_17 = arith.constant dense<0.000000e+00> : vector<2x8x48xf32>
    %87 = vector.multi_reduction <add>, %86, %cst_17 [1] : vector<2x3x8x48xf32> to vector<2x8x48xf32>
    %c0_18 = arith.constant 0 : index
    %c0_19 = arith.constant 0 : index
    %88 = vector.load %arg4[%c0_18, %c0_19] : memref<1x48xf32, #tpu.memory_space<vmem>>, vector<1x48xf32>
    %89 = vector.shape_cast %88 : vector<1x48xf32> to vector<1x1x48xf32>
    %90 = vector.broadcast %89 : vector<1x1x48xf32> to vector<2x8x48xf32>
    %91 = arith.addf %87, %90 : vector<2x8x48xf32>
    %c0_20 = arith.constant 0 : index
    %c0_21 = arith.constant 0 : index
    %c0_22 = arith.constant 0 : index
    %92 = vector.load %arg5[%c0_20, %c0_21, %c0_22] : memref<2x8x48xf32, #tpu.memory_space<vmem>>, vector<2x8x48xf32>
    tpu.vector_store %arg5[%c0_20, %c0_21, %c0_22], %91 {strides = array<i32>} : memref<2x8x48xf32, #tpu.memory_space<vmem>>, vector<2x8x48xf32>,
    return
  }
}

</mosaic_0001>

<llo_original>
// kernel: attention_forward.1
$region0: #{attention_forward.1}
  #allocation0 [shape = 'u32[]', space=smem, size = 0x4, offset = 0x4, fixed_abs, tag = 'smem constant byte address 0x4 - core index']
  #allocation1 [shape = 'u32[72,128]{1,0:T(1,128)}', space=vmem, size = 0x9000, scoped, tag = 'internal scratch']
  %s0 = inlined_call_operand.vmem [shape: f32[48,48], index: 0, kind: input, shape index: {}]
  %s1 = inlined_call_operand.vmem [shape: bf16[48,48], index: 1, kind: input, shape index: {}]
  %s2 = inlined_call_operand.vmem [shape: f32[1,48], index: 2, kind: input, shape index: {}]
  %s3 = inlined_call_operand.vmem [shape: bf16[6,16,48], index: 3, kind: input, shape index: {}]
  %s4 = inlined_call_operand.vmem [shape: f32[1,48], index: 4, kind: input, shape index: {}]
  %s5 = inlined_call_operand.hbm [shape: f32[2,8,48], index: 5, kind: output, shape index: {0}]
  %s6 = inlined_call_operand.hbm [shape: f32[6,8,8], index: 6, kind: output, shape index: {1}]
  %7 = xla_tuple %s5, %s6
  %s8 = sld [smem:[#allocation0]]
  $region38: #{attention_forward.1} parent=0
    _
  %s10 = ssub.s32 1, %s8
  %s11 = scalar_select 0, %s10, %s8
  $region1: #{attention_forward.1} parent=0
    #allocation2 [shape = 'u8[8192]{0}', space=vmem, size = 0x2000, scoped, tag = 'output window, operand 0, single buffered']
    #allocation3 [shape = 's32[1]{0}', space=sflag, size = 0x4, scoped, tag = 'scoped memory for attention_forward.1']
    #allocation4 [shape = 'u8[24576]{0}', space=vmem, size = 0x6000, scoped, tag = 'output window, operand 1, single buffered']
    #allocation5 [shape = 's32[1]{0}', space=sflag, size = 0x4, scoped, tag = 'scoped memory for attention_forward.1']
    %12 = vsyncpa [#allocation3], 0
    %13 = vsyncpa [#allocation5], 0
    // Predicated region
    $region2: #{attention_forward.1} parent=1 // pred_check
      _
    $region3: #{attention_forward.1} parent=1 // pred_check_branch
      %15 = sbr.rel (0) target = $region5
    $region4: #{attention_forward.1} parent=1 // pred_region
      _
    $region5: #{attention_forward.1} parent=1 // pred_fallthru
      _
    // Predicated region
    $region6: #{attention_forward.1} parent=1 // pred_check
      _
    $region7: #{attention_forward.1} parent=1 // pred_check_branch
      %17 = sbr.rel (0) target = $region9
    $region8: #{attention_forward.1} parent=1 // pred_region
      _
    $region9: #{attention_forward.1} parent=1 // pred_fallthru
      _
    // Predicated region
    $region10: #{attention_forward.1} parent=1 // pred_check
      _
    $region11: #{attention_forward.1} parent=1 // pred_check_branch
      %19 = sbr.rel (0) target = $region13
    $region12: #{attention_forward.1} parent=1 // pred_region
      _
    $region13: #{attention_forward.1} parent=1 // pred_fallthru
      _
    // Predicated region
    $region14: #{attention_forward.1} parent=1 // pred_check
      _
    $region15: #{attention_forward.1} parent=1 // pred_check_branch
      %21 = sbr.rel (0) target = $region17
    $region16: #{attention_forward.1} parent=1 // pred_region
      _
    $region17: #{attention_forward.1} parent=1 // pred_fallthru
      _
    // Predicated region
    $region18: #{attention_forward.1} parent=1 // pred_check
      _
    $region19: #{attention_forward.1} parent=1 // pred_check_branch
      %23 = sbr.rel (0) target = $region21
    $region20: #{attention_forward.1} parent=1 // pred_region
      _
    $region21: #{attention_forward.1} parent=1 // pred_fallthru
      _
    %v25 = vld [vmem:[%s0] sm:$0xff]
    %v26 = vld [vmem:[%s0 + $0x8] sm:$0xff]
    %v27 = vld [vmem:[%s0 + $0x10] sm:$0xff]
    %v28 = vld [vmem:[%s0 + $0x18] sm:$0xff]
    %v29 = vld [vmem:[%s0 + $0x20] sm:$0xff]
    %v30 = vld [vmem:[%s0 + $0x28] sm:$0xff]
    %v31 = vpack.c.bf16 %v26, %v25
    %v32 = vpack.c.bf16 %v28, %v27
    %v33 = vpack.c.bf16 %v30, %v29
    %v34 = vld [vmem:[%s1] sm:$0xf]
    %v35 = vld [vmem:[%s1 + $0x4] sm:$0xf]
    %v36 = vld [vmem:[%s1 + $0x8] sm:$0xf]
    %v37 = vld [vmem:[%s1 + $0xc] sm:$0xf]
    %v38 = vld [vmem:[%s1 + $0x10] sm:$0xf]
    %v39 = vld [vmem:[%s1 + $0x14] sm:$0xf]
    %v40 = vld [vmem:[%s2] sm:$0x1]
    %v42 = vperm.slane %v40, 0
    %v50 = vunpack.c.l.b16 %v34
    %v51 = vunpack.c.l.b16 %v35
    %v52 = vunpack.c.l.b16 %v36
    %v53 = vunpack.c.l.b16 %v37
    %v54 = vunpack.c.l.b16 %v38
    %v55 = vunpack.c.l.b16 %v39
    %v56 = vpack.c.b16 %v51, %v50
    %v57 = vpack.c.b16 %v53, %v52
    %v58 = vpack.c.b16 %v55, %v54
    %vm62 = vcmask 392192
    %v64 = vsel %vm62, %v31, 0
    %v67 = vsel %vm62, %v32, 0
    %v70 = vsel %vm62, %v33, 0
    %72 = vmatpush.bf16.msra.mxu0 0
    %73 = vmatpush.bf16.msra.mxu0 0
    %74 = vmatpush.bf16.msra.mxu0 0
    %75 = vmatpush.bf16.msra.mxu0 0
    %76 = vmatpush.bf16.msra.mxu0 0
    %77 = vmatpush.bf16.msra.mxu0 %v58
    %78 = vmatpush.bf16.msra.mxu0 %v57
    %79 = vmatpush.bf16.msra.mxu0 %v56
    %80 = vmatmul.bf16.gmra.mxu0 %v64
    %v81 = vpop.f32.mrf.mxu0
    %v82 = vadd.f32 %v42, %v81
    %v83 = vpop.f32.mrf.mxu0
    %v84 = vadd.f32 %v42, %v83
    %85 = vmatmul.bf16.gmra.mxu0 %v67
    %v86 = vpop.f32.mrf.mxu0
    %v87 = vadd.f32 %v42, %v86
    %v88 = vpop.f32.mrf.mxu0
    %v89 = vadd.f32 %v42, %v88
    %90 = vmatmul.bf16.gmra.mxu0 %v70
    %v91 = vpop.f32.mrf.mxu0
    %v92 = vadd.f32 %v42, %v91
    %v93 = vpop.f32.mrf.mxu0
    %v94 = vadd.f32 %v42, %v93
    %95 = vdwg.mxu0
    %97 = vrot.lane.b32.xlu0 %v82, 112
    %v98 = vpop.permute.xlu0 %97
    %100 = vrot.lane.b32.xlu0 %v82, 96
    %v101 = vpop.permute.xlu0 %100
    %104 = vrot.lane.b32.xlu0 %v89, 112
    %v105 = vpop.permute.xlu0 %104
    %107 = vrot.lane.b32.xlu0 %v89, 96
    %v108 = vpop.permute.xlu0 %107
    %v110 = vpack.c.bf16 %v82, %v82
    %v111 = vpack.c.bf16 %v98, %v98
    %v112 = vpack.c.bf16 %v101, %v101
    %v113 = vpack.c.bf16 %v89, %v89
    %v114 = vpack.c.bf16 %v105, %v105
    %v115 = vpack.c.bf16 %v108, %v108
    %117 = vrot.lane.b32.xlu0 %v84, 112
    %v118 = vpop.permute.xlu0 %117
    %120 = vrot.lane.b32.xlu0 %v84, 96
    %v121 = vpop.permute.xlu0 %120
    %124 = vrot.lane.b32.xlu0 %v92, 112
    %v125 = vpop.permute.xlu0 %124
    %127 = vrot.lane.b32.xlu0 %v92, 96
    %v128 = vpop.permute.xlu0 %127
    %v130 = vpack.c.bf16 %v84, %v84
    %v131 = vpack.c.bf16 %v118, %v118
    %v132 = vpack.c.bf16 %v121, %v121
    %v133 = vpack.c.bf16 %v92, %v92
    %v134 = vpack.c.bf16 %v125, %v125
    %v135 = vpack.c.bf16 %v128, %v128
    %137 = vrot.lane.b32.xlu0 %v87, 112
    %v138 = vpop.permute.xlu0 %137
    %140 = vrot.lane.b32.xlu0 %v87, 96
    %v141 = vpop.permute.xlu0 %140
    %144 = vrot.lane.b32.xlu0 %v94, 112
    %v145 = vpop.permute.xlu0 %144
    %147 = vrot.lane.b32.xlu0 %v94, 96
    %v148 = vpop.permute.xlu0 %147
    %v150 = vpack.c.bf16 %v87, %v87
    %v151 = vpack.c.bf16 %v138, %v138
    %v152 = vpack.c.bf16 %v141, %v141
    %v153 = vpack.c.bf16 %v94, %v94
    %v154 = vpack.c.bf16 %v145, %v145
    %v155 = vpack.c.bf16 %v148, %v148
    %vm156 = vcmask 130048
    %v158 = vsel %vm156, %v110, 0
    %v161 = vsel %vm156, %v130, 0
    %163 = vmatpush.bf16.xpose.msra.mxu0 0
    %164 = vmatpush.bf16.xpose.msra.mxu0 0
    %165 = vmatpush.bf16.xpose.msra.mxu0 0
    %166 = vmatpush.bf16.xpose.msra.mxu0 0
    %167 = vmatpush.bf16.xpose.msra.mxu0 0
    %168 = vmatpush.bf16.xpose.msra.mxu0 0
    %169 = vmatpush.bf16.xpose.msra.mxu0 0
    %170 = vmatpush.bf16.xpose.msra.mxu0 %v161
    %171 = vmatmul.bf16.gmra.mxu0 %v158
    %v172 = vpop.f32.mrf.mxu0
    %v173 = vadd.f32 0.0, %v172
    %v174 = vpop.f32.mrf.mxu0
    %175 = vdwg.mxu0
    %v177 = vsel %vm156, %v111, 0
    %v180 = vsel %vm156, %v131, 0
    %182 = vmatpush.bf16.xpose.msra.mxu0 0
    %183 = vmatpush.bf16.xpose.msra.mxu0 0
    %184 = vmatpush.bf16.xpose.msra.mxu0 0
    %185 = vmatpush.bf16.xpose.msra.mxu0 0
    %186 = vmatpush.bf16.xpose.msra.mxu0 0
    %187 = vmatpush.bf16.xpose.msra.mxu0 0
    %188 = vmatpush.bf16.xpose.msra.mxu0 0
    %189 = vmatpush.bf16.xpose.msra.mxu0 %v180
    %190 = vmatmul.bf16.gmra.mxu0 %v177
    %v191 = vpop.f32.mrf.mxu0
    %v192 = vadd.f32 0.0, %v191
    %v193 = vpop.f32.mrf.mxu0
    %194 = vdwg.mxu0
    %v196 = vsel %vm156, %v112, 0
    %v199 = vsel %vm156, %v132, 0
    %201 = vmatpush.bf16.xpose.msra.mxu0 0
    %202 = vmatpush.bf16.xpose.msra.mxu0 0
    %203 = vmatpush.bf16.xpose.msra.mxu0 0
    %204 = vmatpush.bf16.xpose.msra.mxu0 0
    %205 = vmatpush.bf16.xpose.msra.mxu0 0
    %206 = vmatpush.bf16.xpose.msra.mxu0 0
    %207 = vmatpush.bf16.xpose.msra.mxu0 0
    %208 = vmatpush.bf16.xpose.msra.mxu0 %v199
    %209 = vmatmul.bf16.gmra.mxu0 %v196
    %v210 = vpop.f32.mrf.mxu0
    %v211 = vadd.f32 0.0, %v210
    %v212 = vpop.f32.mrf.mxu0
    %213 = vdwg.mxu0
    %v215 = vsel %vm156, %v113, 0
    %v218 = vsel %vm156, %v133, 0
    %220 = vmatpush.bf16.xpose.msra.mxu0 0
    %221 = vmatpush.bf16.xpose.msra.mxu0 0
    %222 = vmatpush.bf16.xpose.msra.mxu0 0
    %223 = vmatpush.bf16.xpose.msra.mxu0 0
    %224 = vmatpush.bf16.xpose.msra.mxu0 0
    %225 = vmatpush.bf16.xpose.msra.mxu0 0
    %226 = vmatpush.bf16.xpose.msra.mxu0 0
    %227 = vmatpush.bf16.xpose.msra.mxu0 %v218
    %228 = vmatmul.bf16.gmra.mxu0 %v215
    %v229 = vpop.f32.mrf.mxu0
    %v230 = vadd.f32 0.0, %v229
    %v231 = vpop.f32.mrf.mxu0
    %232 = vdwg.mxu0
    %v234 = vsel %vm156, %v114, 0
    %v237 = vsel %vm156, %v134, 0
    %239 = vmatpush.bf16.xpose.msra.mxu0 0
    %240 = vmatpush.bf16.xpose.msra.mxu0 0
    %241 = vmatpush.bf16.xpose.msra.mxu0 0
    %242 = vmatpush.bf16.xpose.msra.mxu0 0
    %243 = vmatpush.bf16.xpose.msra.mxu0 0
    %244 = vmatpush.bf16.xpose.msra.mxu0 0
    %245 = vmatpush.bf16.xpose.msra.mxu0 0
    %246 = vmatpush.bf16.xpose.msra.mxu0 %v237
    %247 = vmatmul.bf16.gmra.mxu0 %v234
    %v248 = vpop.f32.mrf.mxu0
    %v249 = vadd.f32 0.0, %v248
    %v250 = vpop.f32.mrf.mxu0
    %251 = vdwg.mxu0
    %v253 = vsel %vm156, %v115, 0
    %v256 = vsel %vm156, %v135, 0
    %258 = vmatpush.bf16.xpose.msra.mxu0 0
    %259 = vmatpush.bf16.xpose.msra.mxu0 0
    %260 = vmatpush.bf16.xpose.msra.mxu0 0
    %261 = vmatpush.bf16.xpose.msra.mxu0 0
    %262 = vmatpush.bf16.xpose.msra.mxu0 0
    %263 = vmatpush.bf16.xpose.msra.mxu0 0
    %264 = vmatpush.bf16.xpose.msra.mxu0 0
    %265 = vmatpush.bf16.xpose.msra.mxu0 %v256
    %266 = vmatmul.bf16.gmra.mxu0 %v253
    %v267 = vpop.f32.mrf.mxu0
    %v268 = vadd.f32 0.0, %v267
    %v269 = vpop.f32.mrf.mxu0
    %270 = vdwg.mxu0
    %v271 = vmul.f32 %v173, 0.25
    %v272 = vmul.f32 %v192, 0.25
    %v273 = vmul.f32 %v211, 0.25
    %v274 = vmul.f32 %v230, 0.25
    %v275 = vmul.f32 %v249, 0.25
    %v276 = vmul.f32 %v268, 0.25
    %vm277 = vcmask 64512
    %v278 = vsel %vm277, %v271, -inf
    %279 = vmax.xlane.f32.xlu0 %v278
    %v280 = vpop.xlane.xlu0 %279
    %v281 = vsel %vm277, %v272, -inf
    %282 = vmax.xlane.f32.xlu0 %v281
    %v283 = vpop.xlane.xlu0 %282
    %v284 = vsel %vm277, %v273, -inf
    %285 = vmax.xlane.f32.xlu0 %v284
    %v286 = vpop.xlane.xlu0 %285
    %v287 = vsel %vm277, %v274, -inf
    %288 = vmax.xlane.f32.xlu0 %v287
    %v289 = vpop.xlane.xlu0 %288
    %v290 = vsel %vm277, %v275, -inf
    %291 = vmax.xlane.f32.xlu0 %v290
    %v292 = vpop.xlane.xlu0 %291
    %v293 = vsel %vm277, %v276, -inf
    %294 = vmax.xlane.f32.xlu0 %v293
    %v295 = vpop.xlane.xlu0 %294
    %v296 = vsub.f32 %v271, %v280
    %v297 = vsub.f32 %v272, %v283
    %v298 = vsub.f32 %v273, %v286
    %v299 = vsub.f32 %v274, %v289
    %v300 = vsub.f32 %v275, %v292
    %v301 = vsub.f32 %v276, %v295
    %v302 = vmul.f32 %v296, 1.442695
    %v303 = vpow.pop %v302
    %v304 = vmul.f32 %v297, 1.442695
    %v305 = vpow.pop %v304
    %v306 = vmul.f32 %v298, 1.442695
    %v307 = vpow.pop %v306
    %v308 = vmul.f32 %v299, 1.442695
    %v309 = vpow.pop %v308
    %v310 = vmul.f32 %v300, 1.442695
    %v311 = vpow.pop %v310
    %v312 = vmul.f32 %v301, 1.442695
    %v313 = vpow.pop %v312
    %v314 = vsel %vm277, %v303, 0.0
    %315 = vadd.xlane.f32.xlu0 %v314
    %v316 = vpop.xlane.xlu0 %315
    %v317 = vsel %vm277, %v305, 0.0
    %318 = vadd.xlane.f32.xlu0 %v317
    %v319 = vpop.xlane.xlu0 %318
    %v320 = vsel %vm277, %v307, 0.0
    %321 = vadd.xlane.f32.xlu0 %v320
    %v322 = vpop.xlane.xlu0 %321
    %v323 = vsel %vm277, %v309, 0.0
    %324 = vadd.xlane.f32.xlu0 %v323
    %v325 = vpop.xlane.xlu0 %324
    %v326 = vsel %vm277, %v311, 0.0
    %327 = vadd.xlane.f32.xlu0 %v326
    %v328 = vpop.xlane.xlu0 %327
    %v329 = vsel %vm277, %v313, 0.0
    %330 = vadd.xlane.f32.xlu0 %v329
    %v331 = vpop.xlane.xlu0 %330
    %v332 = vrcp.pop %v316
    %v333 = vmul.f32 %v316, %v332
    %v334 = vsub.f32 1.0, %v333
    %v335 = vmul.f32 %v332, %v334
    %v336 = vadd.f32 %v332, %v335
    %vm337 = vweird.f32 %v316
    %vm338 = vweird.f32 %v332
    %vm339 = vmor %vm337, %vm338
    %v340 = vsel %vm339, %v332, %v336
    %v341 = vand.u32 2147483647, %v316
    %vm342 = vcmp.eq.f32.partialorder %v341, 8.507059e+37
    %v343 = vand.u32 %v316, 2147483648
    %v344 = vor.u32 1.1754944e-38, %v343
    %v345 = vsel %vm342, %v344, %v340
    %v346 = vmul.f32 %v303, %v345
    %v347 = vrcp.pop %v319
    %v348 = vmul.f32 %v319, %v347
    %v349 = vsub.f32 1.0, %v348
    %v350 = vmul.f32 %v347, %v349
    %v351 = vadd.f32 %v347, %v350
    %vm352 = vweird.f32 %v319
    %vm353 = vweird.f32 %v347
    %vm354 = vmor %vm352, %vm353
    %v355 = vsel %vm354, %v347, %v351
    %v356 = vand.u32 2147483647, %v319
    %vm357 = vcmp.eq.f32.partialorder %v356, 8.507059e+37
    %v358 = vand.u32 %v319, 2147483648
    %v359 = vor.u32 1.1754944e-38, %v358
    %v360 = vsel %vm357, %v359, %v355
    %v361 = vmul.f32 %v305, %v360
    %v362 = vrcp.pop %v322
    %v363 = vmul.f32 %v322, %v362
    %v364 = vsub.f32 1.0, %v363
    %v365 = vmul.f32 %v362, %v364
    %v366 = vadd.f32 %v362, %v365
    %vm367 = vweird.f32 %v322
    %vm368 = vweird.f32 %v362
    %vm369 = vmor %vm367, %vm368
    %v370 = vsel %vm369, %v362, %v366
    %v371 = vand.u32 2147483647, %v322
    %vm372 = vcmp.eq.f32.partialorder %v371, 8.507059e+37
    %v373 = vand.u32 %v322, 2147483648
    %v374 = vor.u32 1.1754944e-38, %v373
    %v375 = vsel %vm372, %v374, %v370
    %v376 = vmul.f32 %v307, %v375
    %v377 = vrcp.pop %v325
    %v378 = vmul.f32 %v325, %v377
    %v379 = vsub.f32 1.0, %v378
    %v380 = vmul.f32 %v377, %v379
    %v381 = vadd.f32 %v377, %v380
    %vm382 = vweird.f32 %v325
    %vm383 = vweird.f32 %v377
    %vm384 = vmor %vm382, %vm383
    %v385 = vsel %vm384, %v377, %v381
    %v386 = vand.u32 2147483647, %v325
    %vm387 = vcmp.eq.f32.partialorder %v386, 8.507059e+37
    %v388 = vand.u32 %v325, 2147483648
    %v389 = vor.u32 1.1754944e-38, %v388
    %v390 = vsel %vm387, %v389, %v385
    %v391 = vmul.f32 %v309, %v390
    %v392 = vrcp.pop %v328
    %v393 = vmul.f32 %v328, %v392
    %v394 = vsub.f32 1.0, %v393
    %v395 = vmul.f32 %v392, %v394
    %v396 = vadd.f32 %v392, %v395
    %vm397 = vweird.f32 %v328
    %vm398 = vweird.f32 %v392
    %vm399 = vmor %vm397, %vm398
    %v400 = vsel %vm399, %v392, %v396
    %v401 = vand.u32 2147483647, %v328
    %vm402 = vcmp.eq.f32.partialorder %v401, 8.507059e+37
    %v403 = vand.u32 %v328, 2147483648
    %v404 = vor.u32 1.1754944e-38, %v403
    %v405 = vsel %vm402, %v404, %v400
    %v406 = vmul.f32 %v311, %v405
    %v407 = vrcp.pop %v331
    %v408 = vmul.f32 %v331, %v407
    %v409 = vsub.f32 1.0, %v408
    %v410 = vmul.f32 %v407, %v409
    %v411 = vadd.f32 %v407, %v410
    %vm412 = vweird.f32 %v331
    %vm413 = vweird.f32 %v407
    %vm414 = vmor %vm412, %vm413
    %v415 = vsel %vm414, %v407, %v411
    %v416 = vand.u32 2147483647, %v331
    %vm417 = vcmp.eq.f32.partialorder %v416, 8.507059e+37
    %v418 = vand.u32 %v331, 2147483648
    %v419 = vor.u32 1.1754944e-38, %v418
    %v420 = vsel %vm417, %v419, %v415
    %v421 = vmul.f32 %v313, %v420
    %422 = vst.msk [vmem:[#allocation4] sm:$0xff] %vm277, %v346
    %423 = vst.msk [vmem:[#allocation4 + $0x8] sm:$0xff] %vm277, %v361
    %424 = vst.msk [vmem:[#allocation4 + $0x10] sm:$0xff] %vm277, %v376
    %425 = vst.msk [vmem:[#allocation4 + $0x18] sm:$0xff] %vm277, %v391
    %426 = vst.msk [vmem:[#allocation4 + $0x20] sm:$0xff] %vm277, %v406
    %427 = vst.msk [vmem:[#allocation4 + $0x28] sm:$0xff] %vm277, %v421
    %v428 = vpack.c.bf16 %v346, %v346
    %v429 = vpack.c.bf16 %v361, %v361
    %v430 = vpack.c.bf16 %v376, %v376
    %v431 = vpack.c.bf16 %v391, %v391
    %v432 = vpack.c.bf16 %v406, %v406
    %v433 = vpack.c.bf16 %v421, %v421
    %v435 = vsel %vm277, %v428, 0
    %vm437 = vcmask 1043456
    %v439 = vsel %vm437, %v150, 0
    %441 = vmatpush.bf16.msra.mxu0 0
    %442 = vmatpush.bf16.msra.mxu0 0
    %443 = vmatpush.bf16.msra.mxu0 0
    %444 = vmatpush.bf16.msra.mxu0 0
    %445 = vmatpush.bf16.msra.mxu0 0
    %446 = vmatpush.bf16.msra.mxu0 0
    %447 = vmatpush.bf16.msra.mxu0 0
    %448 = vmatpush.bf16.msra.mxu0 %v439
    %449 = vmatmul.bf16.gmra.mxu0 %v435
    %v450 = vpop.f32.mrf.mxu0
    %v451 = vadd.f32 0.0, %v450
    %v452 = vpop.f32.mrf.mxu0
    %453 = vdwg.mxu0
    %v455 = vsel %vm277, %v429, 0
    %v458 = vsel %vm437, %v151, 0
    %460 = vmatpush.bf16.msra.mxu0 0
    %461 = vmatpush.bf16.msra.mxu0 0
    %462 = vmatpush.bf16.msra.mxu0 0
    %463 = vmatpush.bf16.msra.mxu0 0
    %464 = vmatpush.bf16.msra.mxu0 0
    %465 = vmatpush.bf16.msra.mxu0 0
    %466 = vmatpush.bf16.msra.mxu0 0
    %467 = vmatpush.bf16.msra.mxu0 %v458
    %468 = vmatmul.bf16.gmra.mxu0 %v455
    %v469 = vpop.f32.mrf.mxu0
    %v470 = vadd.f32 0.0, %v469
    %v471 = vpop.f32.mrf.mxu0
    %472 = vdwg.mxu0
    %v474 = vsel %vm277, %v430, 0
    %v477 = vsel %vm437, %v152, 0
    %479 = vmatpush.bf16.msra.mxu0 0
    %480 = vmatpush.bf16.msra.mxu0 0
    %481 = vmatpush.bf16.msra.mxu0 0
    %482 = vmatpush.bf16.msra.mxu0 0
    %483 = vmatpush.bf16.msra.mxu0 0
    %484 = vmatpush.bf16.msra.mxu0 0
    %485 = vmatpush.bf16.msra.mxu0 0
    %486 = vmatpush.bf16.msra.mxu0 %v477
    %487 = vmatmul.bf16.gmra.mxu0 %v474
    %v488 = vpop.f32.mrf.mxu0
    %v489 = vadd.f32 0.0, %v488
    %v490 = vpop.f32.mrf.mxu0
    %491 = vdwg.mxu0
    %v493 = vsel %vm277, %v431, 0
    %v496 = vsel %vm437, %v153, 0
    %498 = vmatpush.bf16.msra.mxu0 0
    %499 = vmatpush.bf16.msra.mxu0 0
    %500 = vmatpush.bf16.msra.mxu0 0
    %501 = vmatpush.bf16.msra.mxu0 0
    %502 = vmatpush.bf16.msra.mxu0 0
    %503 = vmatpush.bf16.msra.mxu0 0
    %504 = vmatpush.bf16.msra.mxu0 0
    %505 = vmatpush.bf16.msra.mxu0 %v496
    %506 = vmatmul.bf16.gmra.mxu0 %v493
    %v507 = vpop.f32.mrf.mxu0
    %v508 = vadd.f32 0.0, %v507
    %v509 = vpop.f32.mrf.mxu0
    %510 = vdwg.mxu0
    %v512 = vsel %vm277, %v432, 0
    %v515 = vsel %vm437, %v154, 0
    %517 = vmatpush.bf16.msra.mxu0 0
    %518 = vmatpush.bf16.msra.mxu0 0
    %519 = vmatpush.bf16.msra.mxu0 0
    %520 = vmatpush.bf16.msra.mxu0 0
    %521 = vmatpush.bf16.msra.mxu0 0
    %522 = vmatpush.bf16.msra.mxu0 0
    %523 = vmatpush.bf16.msra.mxu0 0
    %524 = vmatpush.bf16.msra.mxu0 %v515
    %525 = vmatmul.bf16.gmra.mxu0 %v512
    %v526 = vpop.f32.mrf.mxu0
    %v527 = vadd.f32 0.0, %v526
    %v528 = vpop.f32.mrf.mxu0
    %529 = vdwg.mxu0
    %v531 = vsel %vm277, %v433, 0
    %v534 = vsel %vm437, %v155, 0
    %536 = vmatpush.bf16.msra.mxu0 0
    %537 = vmatpush.bf16.msra.mxu0 0
    %538 = vmatpush.bf16.msra.mxu0 0
    %539 = vmatpush.bf16.msra.mxu0 0
    %540 = vmatpush.bf16.msra.mxu0 0
    %541 = vmatpush.bf16.msra.mxu0 0
    %542 = vmatpush.bf16.msra.mxu0 0
    %543 = vmatpush.bf16.msra.mxu0 %v534
    %544 = vmatmul.bf16.gmra.mxu0 %v531
    %v545 = vpop.f32.mrf.mxu0
    %v546 = vadd.f32 0.0, %v545
    %v547 = vpop.f32.mrf.mxu0
    %548 = vdwg.mxu0
    %v549 = vpack.c.bf16 %v451, %v451
    %v550 = vpack.c.bf16 %v470, %v470
    %v551 = vpack.c.bf16 %v489, %v489
    %v552 = vpack.c.bf16 %v508, %v508
    %v553 = vpack.c.bf16 %v527, %v527
    %v554 = vpack.c.bf16 %v546, %v546
    %v555 = vld [vmem:[%s3] sm:$0xf]
    %v556 = vld [vmem:[%s3 + $0x4] sm:$0xf]
    %v557 = vld [vmem:[%s3 + $0x8] sm:$0xf]
    %v558 = vld [vmem:[%s3 + $0xc] sm:$0xf]
    %v559 = vld [vmem:[%s3 + $0x10] sm:$0xf]
    %v560 = vld [vmem:[%s3 + $0x14] sm:$0xf]
    %v561 = vld [vmem:[%s3 + $0x18] sm:$0xf]
    %v562 = vld [vmem:[%s3 + $0x1c] sm:$0xf]
    %v563 = vld [vmem:[%s3 + $0x20] sm:$0xf]
    %v564 = vld [vmem:[%s3 + $0x24] sm:$0xf]
    %v565 = vld [vmem:[%s3 + $0x28] sm:$0xf]
    %v566 = vld [vmem:[%s3 + $0x2c] sm:$0xf]
    %v569 = vunpack.c.l.b16 %v555
    %v570 = vunpack.c.l.b16 %v556
    %v571 = vpack.c.b16 %v570, %v569
    %v574 = vsel %vm156, %v549, 0
    %576 = vmatpush.bf16.msra.mxu0 0
    %577 = vmatpush.bf16.msra.mxu0 0
    %578 = vmatpush.bf16.msra.mxu0 0
    %579 = vmatpush.bf16.msra.mxu0 0
    %580 = vmatpush.bf16.msra.mxu0 0
    %581 = vmatpush.bf16.msra.mxu0 0
    %582 = vmatpush.bf16.msra.mxu0 0
    %583 = vmatpush.bf16.msra.mxu0 %v571
    %584 = vmatmul.bf16.gmra.mxu0 %v574
    %v585 = vpop.f32.mrf.mxu0
    %v586 = vadd.f32 0.0, %v585
    %v587 = vpop.f32.mrf.mxu0
    %588 = vdwg.mxu0
    %v591 = vunpack.c.l.b16 %v557
    %v592 = vunpack.c.l.b16 %v558
    %v593 = vpack.c.b16 %v592, %v591
    %v596 = vsel %vm156, %v550, 0
    %598 = vmatpush.bf16.msra.mxu0 0
    %599 = vmatpush.bf16.msra.mxu0 0
    %600 = vmatpush.bf16.msra.mxu0 0
    %601 = vmatpush.bf16.msra.mxu0 0
    %602 = vmatpush.bf16.msra.mxu0 0
    %603 = vmatpush.bf16.msra.mxu0 0
    %604 = vmatpush.bf16.msra.mxu0 0
    %605 = vmatpush.bf16.msra.mxu0 %v593
    %606 = vmatmul.bf16.gmra.mxu0 %v596
    %v607 = vpop.f32.mrf.mxu0
    %v608 = vadd.f32 0.0, %v607
    %v609 = vpop.f32.mrf.mxu0
    %610 = vdwg.mxu0
    %v613 = vunpack.c.l.b16 %v559
    %v614 = vunpack.c.l.b16 %v560
    %v615 = vpack.c.b16 %v614, %v613
    %v618 = vsel %vm156, %v551, 0
    %620 = vmatpush.bf16.msra.mxu0 0
    %621 = vmatpush.bf16.msra.mxu0 0
    %622 = vmatpush.bf16.msra.mxu0 0
    %623 = vmatpush.bf16.msra.mxu0 0
    %624 = vmatpush.bf16.msra.mxu0 0
    %625 = vmatpush.bf16.msra.mxu0 0
    %626 = vmatpush.bf16.msra.mxu0 0
    %627 = vmatpush.bf16.msra.mxu0 %v615
    %628 = vmatmul.bf16.gmra.mxu0 %v618
    %v629 = vpop.f32.mrf.mxu0
    %v630 = vadd.f32 0.0, %v629
    %v631 = vpop.f32.mrf.mxu0
    %632 = vdwg.mxu0
    %v635 = vunpack.c.l.b16 %v561
    %v636 = vunpack.c.l.b16 %v562
    %v637 = vpack.c.b16 %v636, %v635
    %v640 = vsel %vm156, %v552, 0
    %642 = vmatpush.bf16.msra.mxu0 0
    %643 = vmatpush.bf16.msra.mxu0 0
    %644 = vmatpush.bf16.msra.mxu0 0
    %645 = vmatpush.bf16.msra.mxu0 0
    %646 = vmatpush.bf16.msra.mxu0 0
    %647 = vmatpush.bf16.msra.mxu0 0
    %648 = vmatpush.bf16.msra.mxu0 0
    %649 = vmatpush.bf16.msra.mxu0 %v637
    %650 = vmatmul.bf16.gmra.mxu0 %v640
    %v651 = vpop.f32.mrf.mxu0
    %v652 = vadd.f32 0.0, %v651
    %v653 = vpop.f32.mrf.mxu0
    %654 = vdwg.mxu0
    %v657 = vunpack.c.l.b16 %v563
    %v658 = vunpack.c.l.b16 %v564
    %v659 = vpack.c.b16 %v658, %v657
    %v662 = vsel %vm156, %v553, 0
    %664 = vmatpush.bf16.msra.mxu0 0
    %665 = vmatpush.bf16.msra.mxu0 0
    %666 = vmatpush.bf16.msra.mxu0 0
    %667 = vmatpush.bf16.msra.mxu0 0
    %668 = vmatpush.bf16.msra.mxu0 0
    %669 = vmatpush.bf16.msra.mxu0 0
    %670 = vmatpush.bf16.msra.mxu0 0
    %671 = vmatpush.bf16.msra.mxu0 %v659
    %672 = vmatmul.bf16.gmra.mxu0 %v662
    %v673 = vpop.f32.mrf.mxu0
    %v674 = vadd.f32 0.0, %v673
    %v675 = vpop.f32.mrf.mxu0
    %676 = vdwg.mxu0
    %v679 = vunpack.c.l.b16 %v565
    %v680 = vunpack.c.l.b16 %v566
    %v681 = vpack.c.b16 %v680, %v679
    %v684 = vsel %vm156, %v554, 0
    %686 = vmatpush.bf16.msra.mxu0 0
    %687 = vmatpush.bf16.msra.mxu0 0
    %688 = vmatpush.bf16.msra.mxu0 0
    %689 = vmatpush.bf16.msra.mxu0 0
    %690 = vmatpush.bf16.msra.mxu0 0
    %691 = vmatpush.bf16.msra.mxu0 0
    %692 = vmatpush.bf16.msra.mxu0 0
    %693 = vmatpush.bf16.msra.mxu0 %v681
    %694 = vmatmul.bf16.gmra.mxu0 %v684
    %v695 = vpop.f32.mrf.mxu0
    %v696 = vadd.f32 0.0, %v695
    %v697 = vpop.f32.mrf.mxu0
    %698 = vdwg.mxu0
    %v699 = vsel %vm62, %v586, 0.0
    %v700 = vsel %vm62, %v608, 0.0
    %v701 = vadd.f32 %v699, %v700
    %v702 = vsel %vm62, %v630, 0.0
    %v703 = vadd.f32 %v701, %v702
    %v704 = vsel %vm62, %v652, 0.0
    %v705 = vsel %vm62, %v674, 0.0
    %v706 = vadd.f32 %v704, %v705
    %v707 = vsel %vm62, %v696, 0.0
    %v708 = vadd.f32 %v706, %v707
    %v709 = vld [vmem:[%s4] sm:$0x1]
    %v711 = vperm.slane %v709, 0
    %v713 = vadd.f32 %v703, %v711
    %v714 = vadd.f32 %v708, %v711
    %715 = vst.msk [vmem:[#allocation2] sm:$0xff] %vm62, %v713
    %716 = vst.msk [vmem:[#allocation2 + $0x8] sm:$0xff] %vm62, %v714
    // Predicated region
    $region22: #{attention_forward.1} parent=1 // pred_check
      _
    $region23: #{attention_forward.1} parent=1 // pred_check_branch
      %718 = sbr.rel (0) target = $region25
    $region24: #{attention_forward.1} parent=1 // pred_region
      %720 = vsyncadd [#allocation3], 0
      %s721 = sshll.u32 [#allocation2], 4
      %s722 = int_to_ptr.vmem [resolvable:$true] %s721
      %s723 = sshll.u32 %s5, 4
      %s724 = int_to_ptr.hbm [resolvable:$true] %s723
      %729 = dma.vmem_to_hbm [thread:$0]  %s722, 256, %s724, [#allocation3], 128, 128, 8
    $region25: #{attention_forward.1} parent=1 // pred_fallthru
      _
    // Predicated region
    $region26: #{attention_forward.1} parent=1 // pred_check
      _
    $region27: #{attention_forward.1} parent=1 // pred_check_branch
      %731 = sbr.rel (0) target = $region29
    $region28: #{attention_forward.1} parent=1 // pred_region
      %733 = vsyncadd [#allocation5], 0
      %s734 = sshll.u32 [#allocation4], 4
      %s735 = int_to_ptr.vmem [resolvable:$true] %s734
      %s736 = sshll.u32 %s6, 4
      %s737 = int_to_ptr.hbm [resolvable:$true] %s736
      %742 = dma.vmem_to_hbm [thread:$0]  %s735, 768, %s737, [#allocation5], 128, 128, 8
    $region29: #{attention_forward.1} parent=1 // pred_fallthru
      _
    // Predicated region
    $region30: #{attention_forward.1} parent=1 // pred_check
      _
    $region31: #{attention_forward.1} parent=1 // pred_check_branch
      %744 = sbr.rel (0) target = $region33
    $region32: #{attention_forward.1} parent=1 // pred_region
      %746 = dma.done [#allocation3], 256
    $region33: #{attention_forward.1} parent=1 // pred_fallthru
      _
    // Predicated region
    $region34: #{attention_forward.1} parent=1 // pred_check
      _
    $region35: #{attention_forward.1} parent=1 // pred_check_branch
      %748 = sbr.rel (0) target = $region37
    $region36: #{attention_forward.1} parent=1 // pred_region
      %750 = dma.done [#allocation5], 768
    $region37: #{attention_forward.1} parent=1 // pred_fallthru
      _
    %751 = vsyncpa [#allocation3], 1
    %752 = vsyncpa [#allocation5], 1

</llo_original>
